<compile_context>
chip_gen: v7x
topology: tpu7x:2x2x1
jax: 0.10.0
libtpu: 0.0.40
codegen_flags: <defaults>
</compile_context>

<pallas_src>
import numpy as np
import jax
import jax.numpy as jnp
from jax.experimental import pallas as pl
from jax.experimental.pallas import tpu as pltpu

# ---- problem sizes (small, consistent with the module defaults) ----
B, T, C = 2, 16, 4          # batch, time/seq, channels (channels live at dim 2)
K = 3                       # Conv1d kernel size (padding = K//2, "same")


# --------------------------------------------------------------------------
# Pallas kernel: fused  transpose -> Conv1d(k=3, pad=1) -> transpose back
# --------------------------------------------------------------------------
def move_channels_conv1d_kernel(x_ref, w_ref, b_ref, o_ref):
    # x_ref: [B, T, C]       input in the ORIGINAL (untransposed) layout
    # w_ref: [K, Cin, Cout]  conv weight rearranged so each tap is a (C, O) matmul
    # b_ref: [1, Cout]
    # o_ref: [B, T, Cout]
    b_, t_, c_ = x_ref.shape
    k_, _, o_ = w_ref.shape
    p = k_ // 2

    x = x_ref[...]                                        # [B, T, C]
    pad = jnp.zeros((b_, p, c_), x.dtype)
    xpad = jnp.concatenate([pad, x, pad], axis=1)         # [B, T+2p, C] (sublane concat)

    # Accumulator starts as the broadcast bias -> bias add is free.
    acc = jnp.broadcast_to(b_ref[...].astype(jnp.float32), (b_ * t_, o_))
    for k in range(k_):                                   # static K=3 tap loop
        xs = xpad[:, k:k + t_, :].reshape(b_ * t_, c_)    # shifted slab, (B*T, C)
        acc = acc + jnp.dot(xs, w_ref[k],
                            preferred_element_type=jnp.float32)

    o_ref[...] = acc.reshape(b_, t_, o_).astype(o_ref.dtype)


def move_channels_forward(x, w_kco, bias_row):
    b_, t_, _ = x.shape
    k_, _, o_ = w_kco.shape
    return pl.pallas_call(
        move_channels_conv1d_kernel,
        out_shape=jax.ShapeDtypeStruct((b_, t_, o_), jnp.float32),
        in_specs=[
            pl.BlockSpec(memory_space=pltpu.MemorySpace.VMEM),   # x
            pl.BlockSpec(memory_space=pltpu.MemorySpace.VMEM),   # weights [K,C,O]
            pl.BlockSpec(memory_space=pltpu.MemorySpace.VMEM),   # bias [1,O]
        ],
        out_specs=pl.BlockSpec(memory_space=pltpu.MemorySpace.VMEM),
    )(x, w_kco, bias_row)


# --------------------------------------------------------------------------
# Small wrapper mirroring MoveChannels (incl. the .bias property)
# --------------------------------------------------------------------------
class MoveChannelsPallas:
    """MoveChannels(block=Conv1d(C, C, 3, padding=1), chin=2, chblock=1).

    The two transposes are fused into the kernel and never materialized.
    """

    def __init__(self, conv_weight_oik, conv_bias_o, chin=2, chblock=1):
        assert (chin, chblock) == (2, 1), "kernel fuses the default dim swap"
        # torch Conv1d weight is [O, I, K]; rearrange so tap k is a (Cin, Cout)
        # right-multiply matrix for the channels-last layout.
        self._w_kco = jnp.transpose(conv_weight_oik, (2, 1, 0))   # [K, Cin, Cout]
        self._bias = conv_bias_o
        self._bias_row = conv_bias_o.reshape(1, -1)

    def __call__(self, x):
        return move_channels_forward(x, self._w_kco, self._bias_row)

    @property
    def bias(self):
        # MoveChannels.bias -> self._block.bias
        return self._bias


# --------------------------------------------------------------------------
# Pure-JAX reference: literal transpose -> Conv1d -> transpose back
# --------------------------------------------------------------------------
def move_channels_reference(x, conv_weight_oik, conv_bias_o):
    hi = jax.lax.Precision.HIGHEST
    xt = jnp.swapaxes(x, 2, 1)                            # [B, C, T]  (torch.transpose(x, 2, 1))
    k_ = conv_weight_oik.shape[-1]
    p = k_ // 2
    xp = jnp.pad(xt, ((0, 0), (0, 0), (p, p)))            # [B, C, T+2p]
    t_ = xt.shape[-1]
    y = jnp.broadcast_to(conv_bias_o[None, :, None],
                         (x.shape[0], conv_weight_oik.shape[0], t_)).astype(jnp.float32)
    for k in range(k_):
        y = y + jnp.einsum('oc,bct->bot', conv_weight_oik[:, :, k],
                           xp[:, :, k:k + t_], precision=hi)
    return jnp.swapaxes(y, 2, 1)                          # back to [B, T, C]


if __name__ == "__main__":
    key = jax.random.PRNGKey(0)
    kx, kw, kb = jax.random.split(key, 3)
    x = jax.random.normal(kx, (B, T, C), jnp.float32)
    conv_weight = 0.5 * jax.random.normal(kw, (C, C, K), jnp.float32)   # [O, I, K]
    conv_bias = 0.1 * jax.random.normal(kb, (C,), jnp.float32)

    mod = MoveChannelsPallas(conv_weight, conv_bias)
    out = jax.block_until_ready(mod(x))

    ref = jax.block_until_ready(move_channels_reference(x, conv_weight, conv_bias))
    assert out.shape == (B, T, C)
    assert np.allclose(np.asarray(out), np.asarray(ref), atol=1e-2, rtol=1e-2), (
        "Pallas output does not match JAX reference")
    assert mod.bias.shape == (C,)   # .bias property maps to the wrapped block's bias

    print("KERNEL_OK")
</pallas_src>

<mosaic_0001>
module attributes {stable_mosaic.version = 11 : i64} {
  func.func @move_channels_conv1d_kernel(%arg0: memref<2x16x4xf32, #tpu.memory_space<vmem>>, %arg1: memref<3x4x4xf32, #tpu.memory_space<vmem>>, %arg2: memref<1x4xf32, #tpu.memory_space<vmem>>, %arg3: memref<2x16x4xf32, #tpu.memory_space<vmem>>) attributes {dimension_semantics = [], scalar_prefetch = 0 : i64, scratch_operands = 0 : i64, tpu.core_type = #tpu.core_type<tc>} {
    %c0 = arith.constant 0 : index
    %c0_0 = arith.constant 0 : index
    %c0_1 = arith.constant 0 : index
    %0 = vector.load %arg0[%c0, %c0_0, %c0_1] : memref<2x16x4xf32, #tpu.memory_space<vmem>>, vector<2x16x4xf32>
    %cst = arith.constant 0.000000e+00 : f32
    %1 = vector.broadcast %cst : f32 to vector<2x1x4xf32>
    %2 = tpu.concatenate %1, %0, %1 in 1 : vector<2x1x4xf32>, vector<2x16x4xf32>, vector<2x1x4xf32> -> vector<2x18x4xf32>
    %c0_2 = arith.constant 0 : index
    %c0_3 = arith.constant 0 : index
    %3 = vector.load %arg2[%c0_2, %c0_3] : memref<1x4xf32, #tpu.memory_space<vmem>>, vector<1x4xf32>
    %4 = vector.shape_cast %3 : vector<1x4xf32> to vector<1x4xf32>
    %5 = vector.broadcast %4 : vector<1x4xf32> to vector<32x4xf32>
    %6 = vector.extract_strided_slice %2 {offsets = [0, 0, 0], sizes = [2, 16, 4], strides = [1, 1, 1]} : vector<2x18x4xf32> to vector<2x16x4xf32>
    %7 = vector.shape_cast %6 : vector<2x16x4xf32> to vector<32x4xf32>
    %c0_4 = arith.constant 0 : index
    %c0_5 = arith.constant 0 : index
    %c0_6 = arith.constant 0 : index
    %8 = vector.load %arg1[%c0_4, %c0_5, %c0_6] : memref<3x4x4xf32, #tpu.memory_space<vmem>>, vector<1x4x4xf32>
    %9 = vector.shape_cast %8 : vector<1x4x4xf32> to vector<4x4xf32>
    %cst_7 = arith.constant dense<0.000000e+00> : vector<32x4xf32>
    %10 = tpu.matmul %7, %9, %cst_7 {dimension_numbers = #tpu.dot_dimension_numbers<[1], [0], [0], [1], [0, 0, 1, 1], [], []>} : vector<32x4xf32>, vector<4x4xf32>, vector<32x4xf32> -> vector<32x4xf32>
    %11 = arith.addf %5, %10 : vector<32x4xf32>
    %12 = vector.extract_strided_slice %2 {offsets = [0, 1, 0], sizes = [2, 16, 4], strides = [1, 1, 1]} : vector<2x18x4xf32> to vector<2x16x4xf32>
    %13 = vector.shape_cast %12 : vector<2x16x4xf32> to vector<32x4xf32>
    %c1 = arith.constant 1 : index
    %c0_8 = arith.constant 0 : index
    %c0_9 = arith.constant 0 : index
    %14 = vector.load %arg1[%c1, %c0_8, %c0_9] : memref<3x4x4xf32, #tpu.memory_space<vmem>>, vector<1x4x4xf32>
    %15 = vector.shape_cast %14 : vector<1x4x4xf32> to vector<4x4xf32>
    %cst_10 = arith.constant dense<0.000000e+00> : vector<32x4xf32>
    %16 = tpu.matmul %13, %15, %cst_10 {dimension_numbers = #tpu.dot_dimension_numbers<[1], [0], [0], [1], [0, 0, 1, 1], [], []>} : vector<32x4xf32>, vector<4x4xf32>, vector<32x4xf32> -> vector<32x4xf32>
    %17 = arith.addf %11, %16 : vector<32x4xf32>
    %18 = vector.extract_strided_slice %2 {offsets = [0, 2, 0], sizes = [2, 16, 4], strides = [1, 1, 1]} : vector<2x18x4xf32> to vector<2x16x4xf32>
    %19 = vector.shape_cast %18 : vector<2x16x4xf32> to vector<32x4xf32>
    %c2 = arith.constant 2 : index
    %c0_11 = arith.constant 0 : index
    %c0_12 = arith.constant 0 : index
    %20 = vector.load %arg1[%c2, %c0_11, %c0_12] : memref<3x4x4xf32, #tpu.memory_space<vmem>>, vector<1x4x4xf32>
    %21 = vector.shape_cast %20 : vector<1x4x4xf32> to vector<4x4xf32>
    %cst_13 = arith.constant dense<0.000000e+00> : vector<32x4xf32>
    %22 = tpu.matmul %19, %21, %cst_13 {dimension_numbers = #tpu.dot_dimension_numbers<[1], [0], [0], [1], [0, 0, 1, 1], [], []>} : vector<32x4xf32>, vector<4x4xf32>, vector<32x4xf32> -> vector<32x4xf32>
    %23 = arith.addf %17, %22 : vector<32x4xf32>
    %24 = vector.shape_cast %23 : vector<32x4xf32> to vector<2x16x4xf32>
    %c0_14 = arith.constant 0 : index
    %c0_15 = arith.constant 0 : index
    %c0_16 = arith.constant 0 : index
    %25 = vector.load %arg3[%c0_14, %c0_15, %c0_16] : memref<2x16x4xf32, #tpu.memory_space<vmem>>, vector<2x16x4xf32>
    tpu.vector_store %arg3[%c0_14, %c0_15, %c0_16], %24 {strides = array<i32>} : memref<2x16x4xf32, #tpu.memory_space<vmem>>, vector<2x16x4xf32>,
    return
  }
}

</mosaic_0001>

<llo_original>
// kernel: tpu_custom_call.1
$region0: #{tpu_custom_call.1}
  #allocation0 [shape = 'u32[]', space=smem, size = 0x4, offset = 0x4, fixed_abs, tag = 'smem constant byte address 0x4 - core index']
  #allocation1 [shape = 'u32[144,128]{1,0:T(1,128)}', space=vmem, size = 0x12000, scoped, tag = 'internal scratch']
  %s0 = inlined_call_operand.vmem [shape: f32[2,16,4], index: 0, kind: input, shape index: {}]
  %s1 = inlined_call_operand.vmem [shape: f32[3,4,4], index: 1, kind: input, shape index: {}]
  %s2 = inlined_call_operand.vmem [shape: f32[1,4], index: 2, kind: input, shape index: {}]
  %s3 = inlined_call_operand.vmem [shape: f32[2,16,4], index: 3, kind: output, shape index: {}]
  %s4 = sld [smem:[#allocation0]]
  $region22: #{tpu_custom_call.1} parent=0
    _
  %s6 = ssub.s32 1, %s4
  %s7 = scalar_select 0, %s6, %s4
  // Predicated region
  $region2: #{tpu_custom_call.1} parent=0 // pred_check
    _
  $region3: #{tpu_custom_call.1} parent=0 // pred_check_branch
    %9 = sbr.rel (0) target = $region5
  $region4: #{tpu_custom_call.1} parent=0 // pred_region
    _
  $region5: #{tpu_custom_call.1} parent=0 // pred_fallthru
    _
  // Predicated region
  $region6: #{tpu_custom_call.1} parent=0 // pred_check
    _
  $region7: #{tpu_custom_call.1} parent=0 // pred_check_branch
    %11 = sbr.rel (0) target = $region9
  $region8: #{tpu_custom_call.1} parent=0 // pred_region
    _
  $region9: #{tpu_custom_call.1} parent=0 // pred_fallthru
    _
  // Predicated region
  $region10: #{tpu_custom_call.1} parent=0 // pred_check
    _
  $region11: #{tpu_custom_call.1} parent=0 // pred_check_branch
    %13 = sbr.rel (0) target = $region13
  $region12: #{tpu_custom_call.1} parent=0 // pred_region
    _
  $region13: #{tpu_custom_call.1} parent=0 // pred_fallthru
    _
  %v14 = vld [vmem:[%s0] sm:$0xff]
  %v15 = vld [vmem:[%s0 + $0x8] sm:$0xff]
  %v16 = vld [vmem:[%s0 + $0x10] sm:$0xff]
  %v17 = vld [vmem:[%s0 + $0x18] sm:$0xff]
  %vm22 = vcmask 1040384
  %v23 = vrot.slane %v14, 7
  %v24 = vrot.slane %v15, 7
  %v25 = vsel %vm22, %v23, %v24
  %v26 = vrot.slane %v16, 7
  %v27 = vrot.slane %v17, 7
  %v28 = vsel %vm22, %v26, %v27
  %v33 = vsel %vm22, 0.0, %v23
  %v34 = vsel %vm22, 0.0, %v26
  %v35 = vsel %vm22, %v24, 0.0
  %v36 = vsel %vm22, %v27, 0.0
  %v37 = vld [vmem:[%s2] sm:$0x1]
  %v39 = vlaneseq
  %v40 = vshrl.u32 %v39, 7
  %v41 = vsub.s32 0, %v40
  %v42 = vrot.slane %v37, %v41
  %v44 = vld [vmem:[%s1] sm:$0xf]
  %vm45 = vcmask 31744
  %v47 = vsel %vm45, %v33, 0
  %v49 = vsel %vm45, %v25, 0
  %v52 = vsel %vm45, %v34, 0
  %v54 = vsel %vm45, %v28, 0
  %vm56 = vcmask 1043456
  %v58 = vsel %vm56, %v44, 0
  %60 = vmatprep.subr.mxu0 0.0
  %61 = vmatpush1.msra.mxu0 %v58
  %62 = vmatprep.subr.mxu0 0.0
  %63 = vmatpush1.msra.mxu0 0.0
  %64 = vmatprep.subr.mxu0 0.0
  %65 = vmatpush1.msra.mxu0 0.0
  %66 = vmatprep.subr.mxu0 0.0
  %67 = vmatpush1.msra.mxu0 0.0
  %68 = vmatprep.subr.mxu0 0.0
  %69 = vmatpush1.msra.mxu0 0.0
  %70 = vmatprep.subr.mxu0 0.0
  %71 = vmatpush1.msra.mxu0 0.0
  %72 = vmatprep.subr.mxu0 0.0
  %73 = vmatpush1.msra.mxu0 0.0
  %74 = vmatprep.subr.mxu0 0.0
  %75 = vmatpush1.msra.mxu0 0.0
  %76 = vmatprep.subr.mxu0 0.0
  %77 = vmatpush1.msra.mxu0 0.0
  %78 = vmatprep.subr.mxu0 0.0
  %79 = vmatpush1.msra.mxu0 0.0
  %80 = vmatprep.subr.mxu0 0.0
  %81 = vmatpush1.msra.mxu0 0.0
  %82 = vmatprep.subr.mxu0 0.0
  %83 = vmatpush1.msra.mxu0 0.0
  %84 = vmatprep.subr.mxu0 0.0
  %85 = vmatpush1.msra.mxu0 0.0
  %86 = vmatprep.subr.mxu0 0.0
  %87 = vmatpush1.msra.mxu0 0.0
  %88 = vmatprep.subr.mxu0 0.0
  %89 = vmatpush1.msra.mxu0 0.0
  %90 = vmatprep.subr.mxu0 0.0
  %91 = vmatpush1.msra.mxu0 0.0
  %92 = vmatprep.subr.mxu0 0.0
  %93 = vmatpush1.msra.mxu0 0.0
  %94 = vmatprep.subr.mxu0 0.0
  %95 = vmatpush1.msra.mxu0 0.0
  %96 = vmatprep.subr.mxu0 0.0
  %97 = vmatpush1.msra.mxu0 0.0
  %98 = vmatprep.subr.mxu0 0.0
  %99 = vmatpush1.msra.mxu0 0.0
  %100 = vmatprep.subr.mxu0 0.0
  %101 = vmatpush1.msra.mxu0 0.0
  %102 = vmatprep.subr.mxu0 0.0
  %103 = vmatpush1.msra.mxu0 0.0
  %104 = vmatprep.subr.mxu0 0.0
  %105 = vmatpush1.msra.mxu0 0.0
  %106 = vmatprep.subr.mxu0 0.0
  %107 = vmatpush1.msra.mxu0 0.0
  %108 = vmatprep.subr.mxu0 0.0
  %109 = vmatpush1.msra.mxu0 0.0
  %110 = vmatprep.subr.mxu0 0.0
  %111 = vmatpush1.msra.mxu0 0.0
  %112 = vmatprep.subr.mxu0 0.0
  %113 = vmatpush1.msra.mxu0 0.0
  %114 = vmatprep.subr.mxu0 0.0
  %115 = vmatpush1.msra.mxu0 0.0
  %116 = vmatprep.subr.mxu0 0.0
  %117 = vmatpush1.msra.mxu0 0.0
  %118 = vmatprep.subr.mxu0 0.0
  %119 = vmatpush1.msra.mxu0 0.0
  %120 = vmatprep.subr.mxu0 0.0
  %121 = vmatpush1.msra.mxu0 0.0
  %122 = vmatprep.subr.mxu0 0.0
  %123 = vmatpush1.msra.mxu0 0.0
  %124 = vmatprep.mubr.f32.mxu0 0.0
  %125 = vmatmul.mubr.f32.gmra.mrb[0].mxu0 %v47
  %v126 = vpop.f32.mrb[0].mxu0
  %v127 = vadd.f32 0.0, %v126
  %v128 = vpop.f32.mrb[0].mxu0
  %129 = vmatprep.mubr.f32.mxu0 0.0
  %130 = vmatmul.mubr.f32.gmra.mrb[0].mxu0 %v49
  %v131 = vpop.f32.mrb[0].mxu0
  %v132 = vadd.f32 0.0, %v131
  %v133 = vpop.f32.mrb[0].mxu0
  %134 = vmatprep.mubr.f32.mxu0 0.0
  %135 = vmatmul.mubr.f32.gmra.mrb[0].mxu0 %v52
  %v136 = vpop.f32.mrb[0].mxu0
  %v137 = vadd.f32 0.0, %v136
  %v138 = vpop.f32.mrb[0].mxu0
  %139 = vmatprep.mubr.f32.mxu0 0.0
  %140 = vmatmul.mubr.f32.gmra.mrb[0].mxu0 %v54
  %v141 = vpop.f32.mrb[0].mxu0
  %v142 = vadd.f32 0.0, %v141
  %v143 = vpop.f32.mrb[0].mxu0
  %144 = vdwg.mxu0
  %v145 = vadd.f32 %v42, %v127
  %v146 = vadd.f32 %v42, %v132
  %v147 = vadd.f32 %v42, %v137
  %v148 = vadd.f32 %v42, %v142
  %vm151 = vcmask 1046528
  %v152 = vrot.slane %v33, 1
  %v153 = vrot.slane %v25, 1
  %v154 = vsel %vm151, %v152, %v153
  %v155 = vrot.slane %v35, 1
  %v156 = vsel %vm151, %v153, %v155
  %v157 = vrot.slane %v34, 1
  %v158 = vrot.slane %v28, 1
  %v159 = vsel %vm151, %v157, %v158
  %v160 = vrot.slane %v36, 1
  %v161 = vsel %vm151, %v158, %v160
  %s162 = scalar_lea.vmem %s1, 4
  %v163 = vld [vmem:[%s162] sm:$0xf]
  %v164 = vsel %vm45, %v154, 0
  %v166 = vsel %vm45, %v156, 0
  %v168 = vsel %vm45, %v159, 0
  %v170 = vsel %vm45, %v161, 0
  %v173 = vsel %vm56, %v163, 0
  %175 = vmatprep.subr.mxu0 0.0
  %176 = vmatpush1.msra.mxu0 %v173
  %177 = vmatprep.subr.mxu0 0.0
  %178 = vmatpush1.msra.mxu0 0.0
  %179 = vmatprep.subr.mxu0 0.0
  %180 = vmatpush1.msra.mxu0 0.0
  %181 = vmatprep.subr.mxu0 0.0
  %182 = vmatpush1.msra.mxu0 0.0
  %183 = vmatprep.subr.mxu0 0.0
  %184 = vmatpush1.msra.mxu0 0.0
  %185 = vmatprep.subr.mxu0 0.0
  %186 = vmatpush1.msra.mxu0 0.0
  %187 = vmatprep.subr.mxu0 0.0
  %188 = vmatpush1.msra.mxu0 0.0
  %189 = vmatprep.subr.mxu0 0.0
  %190 = vmatpush1.msra.mxu0 0.0
  %191 = vmatprep.subr.mxu0 0.0
  %192 = vmatpush1.msra.mxu0 0.0
  %193 = vmatprep.subr.mxu0 0.0
  %194 = vmatpush1.msra.mxu0 0.0
  %195 = vmatprep.subr.mxu0 0.0
  %196 = vmatpush1.msra.mxu0 0.0
  %197 = vmatprep.subr.mxu0 0.0
  %198 = vmatpush1.msra.mxu0 0.0
  %199 = vmatprep.subr.mxu0 0.0
  %200 = vmatpush1.msra.mxu0 0.0
  %201 = vmatprep.subr.mxu0 0.0
  %202 = vmatpush1.msra.mxu0 0.0
  %203 = vmatprep.subr.mxu0 0.0
  %204 = vmatpush1.msra.mxu0 0.0
  %205 = vmatprep.subr.mxu0 0.0
  %206 = vmatpush1.msra.mxu0 0.0
  %207 = vmatprep.subr.mxu0 0.0
  %208 = vmatpush1.msra.mxu0 0.0
  %209 = vmatprep.subr.mxu0 0.0
  %210 = vmatpush1.msra.mxu0 0.0
  %211 = vmatprep.subr.mxu0 0.0
  %212 = vmatpush1.msra.mxu0 0.0
  %213 = vmatprep.subr.mxu0 0.0
  %214 = vmatpush1.msra.mxu0 0.0
  %215 = vmatprep.subr.mxu0 0.0
  %216 = vmatpush1.msra.mxu0 0.0
  %217 = vmatprep.subr.mxu0 0.0
  %218 = vmatpush1.msra.mxu0 0.0
  %219 = vmatprep.subr.mxu0 0.0
  %220 = vmatpush1.msra.mxu0 0.0
  %221 = vmatprep.subr.mxu0 0.0
  %222 = vmatpush1.msra.mxu0 0.0
  %223 = vmatprep.subr.mxu0 0.0
  %224 = vmatpush1.msra.mxu0 0.0
  %225 = vmatprep.subr.mxu0 0.0
  %226 = vmatpush1.msra.mxu0 0.0
  %227 = vmatprep.subr.mxu0 0.0
  %228 = vmatpush1.msra.mxu0 0.0
  %229 = vmatprep.subr.mxu0 0.0
  %230 = vmatpush1.msra.mxu0 0.0
  %231 = vmatprep.subr.mxu0 0.0
  %232 = vmatpush1.msra.mxu0 0.0
  %233 = vmatprep.subr.mxu0 0.0
  %234 = vmatpush1.msra.mxu0 0.0
  %235 = vmatprep.subr.mxu0 0.0
  %236 = vmatpush1.msra.mxu0 0.0
  %237 = vmatprep.subr.mxu0 0.0
  %238 = vmatpush1.msra.mxu0 0.0
  %239 = vmatprep.mubr.f32.mxu0 0.0
  %240 = vmatmul.mubr.f32.gmra.mrb[0].mxu0 %v164
  %v241 = vpop.f32.mrb[0].mxu0
  %v242 = vadd.f32 0.0, %v241
  %v243 = vpop.f32.mrb[0].mxu0
  %244 = vmatprep.mubr.f32.mxu0 0.0
  %245 = vmatmul.mubr.f32.gmra.mrb[0].mxu0 %v166
  %v246 = vpop.f32.mrb[0].mxu0
  %v247 = vadd.f32 0.0, %v246
  %v248 = vpop.f32.mrb[0].mxu0
  %249 = vmatprep.mubr.f32.mxu0 0.0
  %250 = vmatmul.mubr.f32.gmra.mrb[0].mxu0 %v168
  %v251 = vpop.f32.mrb[0].mxu0
  %v252 = vadd.f32 0.0, %v251
  %v253 = vpop.f32.mrb[0].mxu0
  %254 = vmatprep.mubr.f32.mxu0 0.0
  %255 = vmatmul.mubr.f32.gmra.mrb[0].mxu0 %v170
  %v256 = vpop.f32.mrb[0].mxu0
  %v257 = vadd.f32 0.0, %v256
  %v258 = vpop.f32.mrb[0].mxu0
  %259 = vdwg.mxu0
  %v260 = vadd.f32 %v145, %v242
  %v261 = vadd.f32 %v146, %v247
  %v262 = vadd.f32 %v147, %v252
  %v263 = vadd.f32 %v148, %v257
  %vm264 = vcmask 1045504
  %v265 = vrot.slane %v33, 2
  %v266 = vrot.slane %v25, 2
  %v267 = vsel %vm264, %v265, %v266
  %v268 = vrot.slane %v35, 2
  %v269 = vsel %vm264, %v266, %v268
  %v270 = vrot.slane %v34, 2
  %v271 = vrot.slane %v28, 2
  %v272 = vsel %vm264, %v270, %v271
  %v273 = vrot.slane %v36, 2
  %v274 = vsel %vm264, %v271, %v273
  %s275 = scalar_lea.vmem %s1, 8
  %v276 = vld [vmem:[%s275] sm:$0xf]
  %v277 = vsel %vm45, %v267, 0
  %v279 = vsel %vm45, %v269, 0
  %v281 = vsel %vm45, %v272, 0
  %v283 = vsel %vm45, %v274, 0
  %v286 = vsel %vm56, %v276, 0
  %288 = vmatprep.subr.mxu0 0.0
  %289 = vmatpush1.msra.mxu0 %v286
  %290 = vmatprep.subr.mxu0 0.0
  %291 = vmatpush1.msra.mxu0 0.0
  %292 = vmatprep.subr.mxu0 0.0
  %293 = vmatpush1.msra.mxu0 0.0
  %294 = vmatprep.subr.mxu0 0.0
  %295 = vmatpush1.msra.mxu0 0.0
  %296 = vmatprep.subr.mxu0 0.0
  %297 = vmatpush1.msra.mxu0 0.0
  %298 = vmatprep.subr.mxu0 0.0
  %299 = vmatpush1.msra.mxu0 0.0
  %300 = vmatprep.subr.mxu0 0.0
  %301 = vmatpush1.msra.mxu0 0.0
  %302 = vmatprep.subr.mxu0 0.0
  %303 = vmatpush1.msra.mxu0 0.0
  %304 = vmatprep.subr.mxu0 0.0
  %305 = vmatpush1.msra.mxu0 0.0
  %306 = vmatprep.subr.mxu0 0.0
  %307 = vmatpush1.msra.mxu0 0.0
  %308 = vmatprep.subr.mxu0 0.0
  %309 = vmatpush1.msra.mxu0 0.0
  %310 = vmatprep.subr.mxu0 0.0
  %311 = vmatpush1.msra.mxu0 0.0
  %312 = vmatprep.subr.mxu0 0.0
  %313 = vmatpush1.msra.mxu0 0.0
  %314 = vmatprep.subr.mxu0 0.0
  %315 = vmatpush1.msra.mxu0 0.0
  %316 = vmatprep.subr.mxu0 0.0
  %317 = vmatpush1.msra.mxu0 0.0
  %318 = vmatprep.subr.mxu0 0.0
  %319 = vmatpush1.msra.mxu0 0.0
  %320 = vmatprep.subr.mxu0 0.0
  %321 = vmatpush1.msra.mxu0 0.0
  %322 = vmatprep.subr.mxu0 0.0
  %323 = vmatpush1.msra.mxu0 0.0
  %324 = vmatprep.subr.mxu0 0.0
  %325 = vmatpush1.msra.mxu0 0.0
  %326 = vmatprep.subr.mxu0 0.0
  %327 = vmatpush1.msra.mxu0 0.0
  %328 = vmatprep.subr.mxu0 0.0
  %329 = vmatpush1.msra.mxu0 0.0
  %330 = vmatprep.subr.mxu0 0.0
  %331 = vmatpush1.msra.mxu0 0.0
  %332 = vmatprep.subr.mxu0 0.0
  %333 = vmatpush1.msra.mxu0 0.0
  %334 = vmatprep.subr.mxu0 0.0
  %335 = vmatpush1.msra.mxu0 0.0
  %336 = vmatprep.subr.mxu0 0.0
  %337 = vmatpush1.msra.mxu0 0.0
  %338 = vmatprep.subr.mxu0 0.0
  %339 = vmatpush1.msra.mxu0 0.0
  %340 = vmatprep.subr.mxu0 0.0
  %341 = vmatpush1.msra.mxu0 0.0
  %342 = vmatprep.subr.mxu0 0.0
  %343 = vmatpush1.msra.mxu0 0.0
  %344 = vmatprep.subr.mxu0 0.0
  %345 = vmatpush1.msra.mxu0 0.0
  %346 = vmatprep.subr.mxu0 0.0
  %347 = vmatpush1.msra.mxu0 0.0
  %348 = vmatprep.subr.mxu0 0.0
  %349 = vmatpush1.msra.mxu0 0.0
  %350 = vmatprep.subr.mxu0 0.0
  %351 = vmatpush1.msra.mxu0 0.0
  %352 = vmatprep.mubr.f32.mxu0 0.0
  %353 = vmatmul.mubr.f32.gmra.mrb[0].mxu0 %v277
  %v354 = vpop.f32.mrb[0].mxu0
  %v355 = vadd.f32 0.0, %v354
  %v356 = vpop.f32.mrb[0].mxu0
  %357 = vmatprep.mubr.f32.mxu0 0.0
  %358 = vmatmul.mubr.f32.gmra.mrb[0].mxu0 %v279
  %v359 = vpop.f32.mrb[0].mxu0
  %v360 = vadd.f32 0.0, %v359
  %v361 = vpop.f32.mrb[0].mxu0
  %362 = vmatprep.mubr.f32.mxu0 0.0
  %363 = vmatmul.mubr.f32.gmra.mrb[0].mxu0 %v281
  %v364 = vpop.f32.mrb[0].mxu0
  %v365 = vadd.f32 0.0, %v364
  %v366 = vpop.f32.mrb[0].mxu0
  %367 = vmatprep.mubr.f32.mxu0 0.0
  %368 = vmatmul.mubr.f32.gmra.mrb[0].mxu0 %v283
  %v369 = vpop.f32.mrb[0].mxu0
  %v370 = vadd.f32 0.0, %v369
  %v371 = vpop.f32.mrb[0].mxu0
  %372 = vdwg.mxu0
  %v373 = vadd.f32 %v260, %v355
  %v374 = vadd.f32 %v261, %v360
  %v375 = vadd.f32 %v262, %v365
  %v376 = vadd.f32 %v263, %v370
  %377 = vst.msk [vmem:[%s3] sm:$0xff] %vm45, %v373
  %378 = vst.msk [vmem:[%s3 + $0x8] sm:$0xff] %vm45, %v374
  %379 = vst.msk [vmem:[%s3 + $0x10] sm:$0xff] %vm45, %v375
  %380 = vst.msk [vmem:[%s3 + $0x18] sm:$0xff] %vm45, %v376
  // Predicated region
  $region14: #{tpu_custom_call.1} parent=0 // pred_check
    _
  $region15: #{tpu_custom_call.1} parent=0 // pred_check_branch
    %382 = sbr.rel (0) target = $region17
  $region16: #{tpu_custom_call.1} parent=0 // pred_region
    _
  $region17: #{tpu_custom_call.1} parent=0 // pred_fallthru
    _
  // Predicated region
  $region18: #{tpu_custom_call.1} parent=0 // pred_check
    _
  $region19: #{tpu_custom_call.1} parent=0 // pred_check_branch
    %384 = sbr.rel (0) target = $region21
  $region20: #{tpu_custom_call.1} parent=0 // pred_region
    _
  $region21: #{tpu_custom_call.1} parent=0 // pred_fallthru
    _

</llo_original>
